<compile_context>
chip_gen: v7x
topology: tpu7x:2x2x1
jax: 0.10.0
libtpu: 0.0.40
codegen_flags: <defaults>
</compile_context>

<pallas_src>
import jax
import jax.numpy as jnp
from jax.experimental import pallas as pl
from jax.experimental.pallas import tpu as pltpu

HIDDEN = 128  # fc1/fc2 width is 128 by construction of the module


def dqn_softmax_kernel(x_ref, w1_ref, b1_ref, w2_ref, b2_ref, wh_ref, bh_ref, o_ref):
    # One (tile_b, in_size) row-tile of the batch.  All math accumulates in f32.
    x = x_ref[...]                                                   # (tile_b, in_size) f32

    # fc1 + ReLU  (tiny K=in_size contraction; no lane padding of x).
    h1 = jnp.dot(x, w1_ref[...], preferred_element_type=jnp.float32) + b1_ref[...]
    h1 = jnp.maximum(h1, 0.0)

    # fc2 + ReLU  (the .view(B, -1) in PyTorch is a no-op for 2-D input).
    # Operands may be bf16 (matmul_dtype) for native MXU throughput; accumulation stays f32.
    h2 = jnp.dot(h1.astype(w2_ref.dtype), w2_ref[...],
                 preferred_element_type=jnp.float32) + b2_ref[...]
    h2 = jnp.maximum(h2, 0.0)

    # head + softmax over dim=1.  Only out_size lanes are computed/stored.
    logits = jnp.dot(h2.astype(wh_ref.dtype), wh_ref[...],
                     preferred_element_type=jnp.float32) + bh_ref[...]
    m = jnp.max(logits, axis=-1, keepdims=True)
    e = jnp.exp(logits - m)
    denom = jnp.sum(e, axis=-1, keepdims=True)
    # Exact normalization (feeds categorical sampling / log-probs downstream).
    o_ref[...] = (e / denom).astype(o_ref.dtype)


def _choose_tiling(B, tile_b=None):
    """Pick (tile_b, n_tiles, b_pad). Rows padded only to a multiple of 8 (sublane)."""
    b8 = ((B + 7) // 8) * 8
    if tile_b is not None:
        tile_b = max(8, (tile_b // 8) * 8)
        n_tiles = pl.cdiv(b8, tile_b)
        return tile_b, n_tiles, n_tiles * tile_b
    if b8 <= 2048:
        # Small batch: 2 tiles when possible (v7x megacore gets both TCs busy), else 1 tile.
        if b8 % 16 == 0:
            return b8 // 2, 2, b8
        return b8, 1, b8
    # Large batch: 1024-row tiles amortize the per-grid-step pipeline overhead.
    tile_b = 1024
    n_tiles = pl.cdiv(b8, tile_b)
    return tile_b, n_tiles, n_tiles * tile_b


def dqn_softmax_forward(x, w1, b1, w2, b2, wh, bh, tile_b=None, matmul_dtype=jnp.float32):
    """x: (B, input_size). Weights stored as (in_features, out_features); biases (1, out)."""
    B, in_size = x.shape
    out_size = wh.shape[1]
    assert w1.shape == (in_size, HIDDEN) and w2.shape == (HIDDEN, HIDDEN)
    assert wh.shape == (HIDDEN, out_size) and out_size <= 128

    tile_b, n_tiles, b_pad = _choose_tiling(B, tile_b)

    x = x.astype(jnp.float32)
    x_p = x if b_pad == B else jnp.zeros((b_pad, in_size), jnp.float32).at[:B].set(x)

    # Optionally cast the fc2/head matmul weights (the bulk of the weight bytes) to bf16.
    w2_c = w2.astype(matmul_dtype)
    wh_c = wh.astype(matmul_dtype)

    const_spec = lambda shape: pl.BlockSpec(shape, lambda i: (0, 0))  # VMEM-resident weights

    w_itemsize = jnp.dtype(matmul_dtype).itemsize
    cost = pl.CostEstimate(
        flops=2 * b_pad * (in_size * HIDDEN + HIDDEN * HIDDEN + HIDDEN * out_size),
        transcendentals=b_pad * (out_size + 1),            # exp per output lane + divide per row
        bytes_accessed=(4 * (x_p.size + w1.size + b1.size + b2.size + bh.size
                             + b_pad * out_size)
                        + w_itemsize * (w2_c.size + wh_c.size)),
    )

    out = pl.pallas_call(
        dqn_softmax_kernel,
        out_shape=jax.ShapeDtypeStruct((b_pad, out_size), jnp.float32),
        grid=(n_tiles,),
        in_specs=[
            pl.BlockSpec((tile_b, in_size), lambda i: (i, 0)),  # x row-tile (no lane padding)
            const_spec((in_size, HIDDEN)),                      # w1
            const_spec((1, HIDDEN)),                            # b1
            const_spec((HIDDEN, HIDDEN)),                       # w2
            const_spec((1, HIDDEN)),                            # b2
            const_spec((HIDDEN, out_size)),                     # wh (narrow N = out_size)
            const_spec((1, out_size)),                          # bh
        ],
        out_specs=pl.BlockSpec((tile_b, out_size), lambda i: (i, 0)),
        compiler_params=pltpu.CompilerParams(
            dimension_semantics=("parallel",),                  # shard batch tiles across TCs
        ),
        cost_estimate=cost,
    )(x_p, w1, b1, w2_c, b2, wh_c, bh)

    return out if b_pad == B else out[:B]


def init_params(key, input_size, output_size, hidden=HIDDEN):
    """Deterministic init mimicking PyTorch nn.Linear default: U(-1/sqrt(fan_in), +1/sqrt(fan_in))."""
    ks = jax.random.split(key, 6)

    def linear(kw, kb, fan_in, fan_out):
        bound = 1.0 / jnp.sqrt(jnp.float32(fan_in))
        w = jax.random.uniform(kw, (fan_in, fan_out), jnp.float32, -bound, bound)
        b = jax.random.uniform(kb, (1, fan_out), jnp.float32, -bound, bound)
        return w, b

    w1, b1 = linear(ks[0], ks[1], input_size, hidden)
    w2, b2 = linear(ks[2], ks[3], hidden, hidden)
    wh, bh = linear(ks[4], ks[5], hidden, output_size)
    return w1, b1, w2, b2, wh, bh


if __name__ == "__main__":
    # Acrobot-v1: observation dim 6, action dim 3.  Batch of stacked rollout states.
    batch, input_size, output_size = 300, 6, 3   # pads to 304 rows -> two 152-row parallel tiles

    key = jax.random.PRNGKey(0)
    k_x, k_p = jax.random.split(key)
    x = jax.random.normal(k_x, (batch, input_size), jnp.float32)
    params = init_params(k_p, input_size, output_size)

    out = dqn_softmax_forward(x, *params)
    out = jax.block_until_ready(out)

    # Pure-JAX reference (same math, no kernel).
    w1, b1, w2, b2, wh, bh = params
    h1 = jnp.maximum(x @ w1 + b1, 0.0)
    h2 = jnp.maximum(h1 @ w2 + b2, 0.0)
    ref = jax.nn.softmax(h2 @ wh + bh, axis=1)

    assert out.shape == (batch, output_size)
    assert jnp.allclose(out, ref, atol=2e-3, rtol=2e-3)
    assert jnp.allclose(jnp.sum(out, axis=1), 1.0, atol=1e-5)   # exact normalization

    # Also exercise the bf16-matmul path (pays off at large batch on v6e/v7x); looser tolerance.
    out_bf16 = jax.block_until_ready(
        dqn_softmax_forward(x, *params, matmul_dtype=jnp.bfloat16))
    assert jnp.allclose(out_bf16, ref, atol=5e-2, rtol=5e-2)

    print("KERNEL_OK")
</pallas_src>

<mosaic_0001>
module attributes {stable_mosaic.version = 11 : i64} {
  func.func @dqn_softmax_kernel(%arg0: i32, %arg1: memref<152x6xf32, #tpu.memory_space<vmem>>, %arg2: memref<6x128xf32, #tpu.memory_space<vmem>>, %arg3: memref<1x128xf32, #tpu.memory_space<vmem>>, %arg4: memref<128x128xf32, #tpu.memory_space<vmem>>, %arg5: memref<1x128xf32, #tpu.memory_space<vmem>>, %arg6: memref<128x3xf32, #tpu.memory_space<vmem>>, %arg7: memref<1x3xf32, #tpu.memory_space<vmem>>, %arg8: memref<152x3xf32, #tpu.memory_space<vmem>>) attributes {dimension_semantics = [#tpu.dimension_semantics<parallel>], iteration_bounds = array<i64: 2>, scalar_prefetch = 0 : i64, scratch_operands = 0 : i64, tpu.core_type = #tpu.core_type<tc>, window_params = [{transform_indices = @transform_0, window_bounds = array<i64: 152, 6>}, {pipeline_mode = #tpu.pipeline_mode<synchronous>, transform_indices = @transform_1, window_bounds = array<i64: 6, 128>}, {pipeline_mode = #tpu.pipeline_mode<synchronous>, transform_indices = @transform_2, window_bounds = array<i64: 1, 128>}, {pipeline_mode = #tpu.pipeline_mode<synchronous>, transform_indices = @transform_3, window_bounds = array<i64: 128, 128>}, {pipeline_mode = #tpu.pipeline_mode<synchronous>, transform_indices = @transform_4, window_bounds = array<i64: 1, 128>}, {pipeline_mode = #tpu.pipeline_mode<synchronous>, transform_indices = @transform_5, window_bounds = array<i64: 128, 3>}, {pipeline_mode = #tpu.pipeline_mode<synchronous>, transform_indices = @transform_6, window_bounds = array<i64: 1, 3>}, {transform_indices = @transform_7, window_bounds = array<i64: 152, 3>}]} {
    %c0 = arith.constant 0 : index
    %c0_0 = arith.constant 0 : index
    %0 = vector.load %arg1[%c0, %c0_0] : memref<152x6xf32, #tpu.memory_space<vmem>>, vector<152x6xf32>
    %c0_1 = arith.constant 0 : index
    %c0_2 = arith.constant 0 : index
    %1 = vector.load %arg2[%c0_1, %c0_2] : memref<6x128xf32, #tpu.memory_space<vmem>>, vector<6x128xf32>
    %cst = arith.constant dense<0.000000e+00> : vector<152x128xf32>
    %2 = tpu.matmul %0, %1, %cst {dimension_numbers = #tpu.dot_dimension_numbers<[1], [0], [0], [1], [0, 0, 1, 1], [], []>} : vector<152x6xf32>, vector<6x128xf32>, vector<152x128xf32> -> vector<152x128xf32>
    %c0_3 = arith.constant 0 : index
    %c0_4 = arith.constant 0 : index
    %3 = vector.load %arg3[%c0_3, %c0_4] : memref<1x128xf32, #tpu.memory_space<vmem>>, vector<1x128xf32>
    %4 = vector.broadcast %3 : vector<1x128xf32> to vector<152x128xf32>
    %5 = arith.addf %2, %4 : vector<152x128xf32>
    %cst_5 = arith.constant 0.000000e+00 : f32
    %6 = vector.broadcast %cst_5 : f32 to vector<152x128xf32>
    %7 = arith.maximumf %5, %6 : vector<152x128xf32>
    %c0_6 = arith.constant 0 : index
    %c0_7 = arith.constant 0 : index
    %8 = vector.load %arg4[%c0_6, %c0_7] : memref<128x128xf32, #tpu.memory_space<vmem>>, vector<128x128xf32>
    %cst_8 = arith.constant dense<0.000000e+00> : vector<152x128xf32>
    %9 = tpu.matmul %7, %8, %cst_8 {dimension_numbers = #tpu.dot_dimension_numbers<[1], [0], [0], [1], [0, 0, 1, 1], [], []>} : vector<152x128xf32>, vector<128x128xf32>, vector<152x128xf32> -> vector<152x128xf32>
    %c0_9 = arith.constant 0 : index
    %c0_10 = arith.constant 0 : index
    %10 = vector.load %arg5[%c0_9, %c0_10] : memref<1x128xf32, #tpu.memory_space<vmem>>, vector<1x128xf32>
    %11 = vector.broadcast %10 : vector<1x128xf32> to vector<152x128xf32>
    %12 = arith.addf %9, %11 : vector<152x128xf32>
    %cst_11 = arith.constant 0.000000e+00 : f32
    %13 = vector.broadcast %cst_11 : f32 to vector<152x128xf32>
    %14 = arith.maximumf %12, %13 : vector<152x128xf32>
    %c0_12 = arith.constant 0 : index
    %c0_13 = arith.constant 0 : index
    %15 = vector.load %arg6[%c0_12, %c0_13] : memref<128x3xf32, #tpu.memory_space<vmem>>, vector<128x3xf32>
    %cst_14 = arith.constant dense<0.000000e+00> : vector<152x3xf32>
    %16 = tpu.matmul %14, %15, %cst_14 {dimension_numbers = #tpu.dot_dimension_numbers<[1], [0], [0], [1], [0, 0, 1, 1], [], []>} : vector<152x128xf32>, vector<128x3xf32>, vector<152x3xf32> -> vector<152x3xf32>
    %c0_15 = arith.constant 0 : index
    %c0_16 = arith.constant 0 : index
    %17 = vector.load %arg7[%c0_15, %c0_16] : memref<1x3xf32, #tpu.memory_space<vmem>>, vector<1x3xf32>
    %18 = vector.broadcast %17 : vector<1x3xf32> to vector<152x3xf32>
    %19 = arith.addf %16, %18 : vector<152x3xf32>
    %cst_17 = arith.constant dense<0xFF800000> : vector<152xf32>
    %20 = vector.multi_reduction <maximumf>, %19, %cst_17 [1] : vector<152x3xf32> to vector<152xf32>
    %21 = vector.shape_cast %20 : vector<152xf32> to vector<152x1xf32>
    %22 = vector.broadcast %21 : vector<152x1xf32> to vector<152x3xf32>
    %23 = arith.subf %19, %22 : vector<152x3xf32>
    %24 = math.exp %23 : vector<152x3xf32>
    %cst_18 = arith.constant dense<0.000000e+00> : vector<152xf32>
    %25 = vector.multi_reduction <add>, %24, %cst_18 [1] : vector<152x3xf32> to vector<152xf32>
    %26 = vector.shape_cast %25 : vector<152xf32> to vector<152x1xf32>
    %27 = vector.broadcast %26 : vector<152x1xf32> to vector<152x3xf32>
    %28 = arith.divf %24, %27 : vector<152x3xf32>
    %c0_19 = arith.constant 0 : index
    %c0_20 = arith.constant 0 : index
    %29 = vector.load %arg8[%c0_19, %c0_20] : memref<152x3xf32, #tpu.memory_space<vmem>>, vector<152x3xf32>
    tpu.vector_store %arg8[%c0_19, %c0_20], %28 {strides = array<i32>} : memref<152x3xf32, #tpu.memory_space<vmem>>, vector<152x3xf32>,
    return
  }
  func.func @transform_0(%arg0: i32) -> (i32, i32) {
    %c0_i32 = arith.constant 0 : i32
    %c0_i32_0 = arith.constant 0 : i32
    return %arg0, %c0_i32 : i32, i32
  }
  func.func @transform_1(%arg0: i32) -> (i32, i32) {
    %c0_i32 = arith.constant 0 : i32
    %c0_i32_0 = arith.constant 0 : i32
    %c0_i32_1 = arith.constant 0 : i32
    return %c0_i32, %c0_i32_0 : i32, i32
  }
  func.func @transform_2(%arg0: i32) -> (i32, i32) {
    %c0_i32 = arith.constant 0 : i32
    %c0_i32_0 = arith.constant 0 : i32
    %c0_i32_1 = arith.constant 0 : i32
    return %c0_i32, %c0_i32_0 : i32, i32
  }
  func.func @transform_3(%arg0: i32) -> (i32, i32) {
    %c0_i32 = arith.constant 0 : i32
    %c0_i32_0 = arith.constant 0 : i32
    %c0_i32_1 = arith.constant 0 : i32
    return %c0_i32, %c0_i32_0 : i32, i32
  }
  func.func @transform_4(%arg0: i32) -> (i32, i32) {
    %c0_i32 = arith.constant 0 : i32
    %c0_i32_0 = arith.constant 0 : i32
    %c0_i32_1 = arith.constant 0 : i32
    return %c0_i32, %c0_i32_0 : i32, i32
  }
  func.func @transform_5(%arg0: i32) -> (i32, i32) {
    %c0_i32 = arith.constant 0 : i32
    %c0_i32_0 = arith.constant 0 : i32
    %c0_i32_1 = arith.constant 0 : i32
    return %c0_i32, %c0_i32_0 : i32, i32
  }
  func.func @transform_6(%arg0: i32) -> (i32, i32) {
    %c0_i32 = arith.constant 0 : i32
    %c0_i32_0 = arith.constant 0 : i32
    %c0_i32_1 = arith.constant 0 : i32
    return %c0_i32, %c0_i32_0 : i32, i32
  }
  func.func @transform_7(%arg0: i32) -> (i32, i32) {
    %c0_i32 = arith.constant 0 : i32
    %c0_i32_0 = arith.constant 0 : i32
    return %arg0, %c0_i32 : i32, i32
  }
}

</mosaic_0001>

<llo_original>
// kernel: tpu_custom_call.1
$region0: #{tpu_custom_call.1}
  #allocation0 [shape = 'u32[]', space=smem, size = 0x4, offset = 0x4, fixed_abs, tag = 'smem constant byte address 0x4 - core index']
  #allocation1 [shape = 'u32[144,128]{1,0:T(1,128)}', space=vmem, size = 0x12000, scoped, tag = 'internal scratch']
  %s0 = inlined_call_operand.vmem [shape: f32[304,6], index: 0, kind: input, shape index: {}]
  %s1 = inlined_call_operand.vmem [shape: f32[6,128], index: 1, kind: input, shape index: {}]
  %s2 = inlined_call_operand.vmem [shape: f32[1,128], index: 2, kind: input, shape index: {}]
  %s3 = inlined_call_operand.vmem [shape: f32[128,128], index: 3, kind: input, shape index: {}]
  %s4 = inlined_call_operand.vmem [shape: f32[1,128], index: 4, kind: input, shape index: {}]
  %s5 = inlined_call_operand.vmem [shape: f32[128,3], index: 5, kind: input, shape index: {}]
  %s6 = inlined_call_operand.vmem [shape: f32[1,3], index: 6, kind: input, shape index: {}]
  %s7 = inlined_call_operand.vmem [shape: f32[304,3], index: 7, kind: output, shape index: {}]
  %s8 = sld [smem:[#allocation0]]
  $region61: #{tpu_custom_call.1} parent=0
    _
  %s10 = ssub.s32 1, %s8
  %s11 = scalar_select 0, %s10, %s8
  loop: start=0, step=1, limit=4
  $region2: #{tpu_custom_call.1} parent=0 // loop_pre_header
    _
  $region3: #{tpu_custom_call.1} parent=0 // loop_header
    %s13 = sphi 0, %s17
    %p14 = scmp.ge.s32.totalorder %s13, 4
    %s23 = sphi 0, %s25
    %s26 = sphi 0, %s23
    %s27 = sphi 0, %s26
    %s43 = sphi 0, %s27
    %s47 = sphi 0, %s47
    %s49 = sphi 0, %s47
    %s50 = sphi 0, %s49
    %s64 = sphi 0, %s50
    %s68 = sphi 0, %s68
    %s70 = sphi 0, %s68
    %s71 = sphi 0, %s70
    %s85 = sphi 0, %s71
    %s89 = sphi 0, %s89
    %s91 = sphi 0, %s89
    %s92 = sphi 0, %s91
    %s106 = sphi 0, %s92
    %s110 = sphi 0, %s110
    %s112 = sphi 0, %s110
    %s113 = sphi 0, %s112
    %s127 = sphi 0, %s113
    %s131 = sphi 0, %s131
    %s133 = sphi 0, %s131
    %s134 = sphi 0, %s133
    %s148 = sphi 0, %s134
    %s152 = sphi 0, %s152
    %s154 = sphi 0, %s152
    %s155 = sphi 0, %s154
    %s169 = sphi 0, %s155
    %s175 = sphi 0, %s177
    %s178 = sphi 0, %s175
    %s179 = sphi 0, %s178
    %s195 = sphi 0, %s179
  $region4: #{tpu_custom_call.1} parent=0 // loop_header_branch
    %16 = sbr.rel (%p14) target = $region8
  $region5: #{tpu_custom_call.1} parent=0 // loop_body
    %s18 = ssub.s32 %s13, 1
    %s19 = ssub.s32 %s13, 2
    %s20 = sadd.s32 %s13, 1
    %s21 = ssub.s32 %s13, %s20
    %p22 = scmp.eq.s32.totalorder %s21, 0
    %s24 = sadd.s32 %s23, 1
    %s25 = scalar_select %p22, %s23, %s24
    %p28 = pneg %p22
    %p29 = scmp.eq.s32.totalorder %s13, 1
    %p30 = por %p28, %p29
    %p31 = scmp.ne.s32.totalorder %s23, %s26
    %p32 = scmp.eq.s32.totalorder %s13, 0
    %p33 = por %p31, %p32
    %p34 = scmp.ne.s32.totalorder %s23, %s26
    %p35 = scmp.eq.s32.totalorder %s18, 1
    %p36 = por %p34, %p35
    %p37 = scmp.ne.s32.totalorder %s26, %s27
    %p38 = scmp.eq.s32.totalorder %s18, 0
    %p39 = por %p37, %p38
    %p40 = scmp.ne.s32.totalorder %s26, %s27
    %p41 = scmp.eq.s32.totalorder %s19, 1
    %p42 = por %p40, %p41
    %p44 = scmp.ne.s32.totalorder %s27, %s43
    %p45 = scmp.eq.s32.totalorder %s19, 0
    %p46 = por %p44, %p45
    %s48 = sadd.s32 %s47, 1
    %p51 = scmp.eq.s32.totalorder %s13, 1
    %p52 = scmp.ne.s32.totalorder %s47, %s49
    %p53 = scmp.eq.s32.totalorder %s13, 0
    %p54 = por %p52, %p53
    %p55 = scmp.ne.s32.totalorder %s47, %s49
    %p56 = scmp.eq.s32.totalorder %s18, 1
    %p57 = por %p55, %p56
    %p58 = scmp.ne.s32.totalorder %s49, %s50
    %p59 = scmp.eq.s32.totalorder %s18, 0
    %p60 = por %p58, %p59
    %p61 = scmp.ne.s32.totalorder %s49, %s50
    %p62 = scmp.eq.s32.totalorder %s19, 1
    %p63 = por %p61, %p62
    %p65 = scmp.ne.s32.totalorder %s50, %s64
    %p66 = scmp.eq.s32.totalorder %s19, 0
    %p67 = por %p65, %p66
    %s69 = sadd.s32 %s68, 1
    %p72 = scmp.eq.s32.totalorder %s13, 1
    %p73 = scmp.ne.s32.totalorder %s68, %s70
    %p74 = scmp.eq.s32.totalorder %s13, 0
    %p75 = por %p73, %p74
    %p76 = scmp.ne.s32.totalorder %s68, %s70
    %p77 = scmp.eq.s32.totalorder %s18, 1
    %p78 = por %p76, %p77
    %p79 = scmp.ne.s32.totalorder %s70, %s71
    %p80 = scmp.eq.s32.totalorder %s18, 0
    %p81 = por %p79, %p80
    %p82 = scmp.ne.s32.totalorder %s70, %s71
    %p83 = scmp.eq.s32.totalorder %s19, 1
    %p84 = por %p82, %p83
    %p86 = scmp.ne.s32.totalorder %s71, %s85
    %p87 = scmp.eq.s32.totalorder %s19, 0
    %p88 = por %p86, %p87
    %s90 = sadd.s32 %s89, 1
    %p93 = scmp.eq.s32.totalorder %s13, 1
    %p94 = scmp.ne.s32.totalorder %s89, %s91
    %p95 = scmp.eq.s32.totalorder %s13, 0
    %p96 = por %p94, %p95
    %p97 = scmp.ne.s32.totalorder %s89, %s91
    %p98 = scmp.eq.s32.totalorder %s18, 1
    %p99 = por %p97, %p98
    %p100 = scmp.ne.s32.totalorder %s91, %s92
    %p101 = scmp.eq.s32.totalorder %s18, 0
    %p102 = por %p100, %p101
    %p103 = scmp.ne.s32.totalorder %s91, %s92
    %p104 = scmp.eq.s32.totalorder %s19, 1
    %p105 = por %p103, %p104
    %p107 = scmp.ne.s32.totalorder %s92, %s106
    %p108 = scmp.eq.s32.totalorder %s19, 0
    %p109 = por %p107, %p108
    %s111 = sadd.s32 %s110, 1
    %p114 = scmp.eq.s32.totalorder %s13, 1
    %p115 = scmp.ne.s32.totalorder %s110, %s112
    %p116 = scmp.eq.s32.totalorder %s13, 0
    %p117 = por %p115, %p116
    %p118 = scmp.ne.s32.totalorder %s110, %s112
    %p119 = scmp.eq.s32.totalorder %s18, 1
    %p120 = por %p118, %p119
    %p121 = scmp.ne.s32.totalorder %s112, %s113
    %p122 = scmp.eq.s32.totalorder %s18, 0
    %p123 = por %p121, %p122
    %p124 = scmp.ne.s32.totalorder %s112, %s113
    %p125 = scmp.eq.s32.totalorder %s19, 1
    %p126 = por %p124, %p125
    %p128 = scmp.ne.s32.totalorder %s113, %s127
    %p129 = scmp.eq.s32.totalorder %s19, 0
    %p130 = por %p128, %p129
    %s132 = sadd.s32 %s131, 1
    %p135 = scmp.eq.s32.totalorder %s13, 1
    %p136 = scmp.ne.s32.totalorder %s131, %s133
    %p137 = scmp.eq.s32.totalorder %s13, 0
    %p138 = por %p136, %p137
    %p139 = scmp.ne.s32.totalorder %s131, %s133
    %p140 = scmp.eq.s32.totalorder %s18, 1
    %p141 = por %p139, %p140
    %p142 = scmp.ne.s32.totalorder %s133, %s134
    %p143 = scmp.eq.s32.totalorder %s18, 0
    %p144 = por %p142, %p143
    %p145 = scmp.ne.s32.totalorder %s133, %s134
    %p146 = scmp.eq.s32.totalorder %s19, 1
    %p147 = por %p145, %p146
    %p149 = scmp.ne.s32.totalorder %s134, %s148
    %p150 = scmp.eq.s32.totalorder %s19, 0
    %p151 = por %p149, %p150
    %s153 = sadd.s32 %s152, 1
    %p156 = scmp.eq.s32.totalorder %s13, 1
    %p157 = scmp.ne.s32.totalorder %s152, %s154
    %p158 = scmp.eq.s32.totalorder %s13, 0
    %p159 = por %p157, %p158
    %p160 = scmp.ne.s32.totalorder %s152, %s154
    %p161 = scmp.eq.s32.totalorder %s18, 1
    %p162 = por %p160, %p161
    %p163 = scmp.ne.s32.totalorder %s154, %s155
    %p164 = scmp.eq.s32.totalorder %s18, 0
    %p165 = por %p163, %p164
    %p166 = scmp.ne.s32.totalorder %s154, %s155
    %p167 = scmp.eq.s32.totalorder %s19, 1
    %p168 = por %p166, %p167
    %p170 = scmp.ne.s32.totalorder %s155, %s169
    %p171 = scmp.eq.s32.totalorder %s19, 0
    %p172 = por %p170, %p171
    %s173 = ssub.s32 %s13, %s20
    %p174 = scmp.eq.s32.totalorder %s173, 0
    %s176 = sadd.s32 %s175, 1
    %s177 = scalar_select %p174, %s175, %s176
    %p180 = pneg %p174
    %p181 = scmp.eq.s32.totalorder %s13, 1
    %p182 = por %p180, %p181
    %p183 = scmp.ne.s32.totalorder %s175, %s178
    %p184 = scmp.eq.s32.totalorder %s13, 0
    %p185 = por %p183, %p184
    %p186 = scmp.ne.s32.totalorder %s175, %s178
    %p187 = scmp.eq.s32.totalorder %s18, 1
    %p188 = por %p186, %p187
    %p189 = scmp.ne.s32.totalorder %s178, %s179
    %p190 = scmp.eq.s32.totalorder %s18, 0
    %p191 = por %p189, %p190
    %p192 = scmp.ne.s32.totalorder %s178, %s179
    %p193 = scmp.eq.s32.totalorder %s19, 1
    %p194 = por %p192, %p193
    %p196 = scmp.ne.s32.totalorder %s179, %s195
    %p197 = scmp.eq.s32.totalorder %s19, 0
    %p198 = por %p196, %p197
    %p199 = scmp.le.s32.totalorder 1, %s13
    %p200 = scmp.lt.s32.totalorder %s13, 3
    %p201 = pnand %p199, %p200
    %p202 = pneg %p201
    // Predicated region
    $region9: #{tpu_custom_call.1} parent=5 // pred_check
      _
    $region10: #{tpu_custom_call.1} parent=5 // pred_check_branch
      %204 = sbr.rel (%p201) target = $region12
    $region11: #{tpu_custom_call.1} parent=5 // pred_region
      %s205 = ssub.s32 %s13, 1
      // Predicated region
      $region13: #{tpu_custom_call.1} parent=11 // pred_check
        %p206 = pneg %p60
      $region14: #{tpu_custom_call.1} parent=11 // pred_check_branch
        %208 = sbr.rel (%p206) target = $region16
      $region15: #{tpu_custom_call.1} parent=11 // pred_region
        _
      $region16: #{tpu_custom_call.1} parent=11 // pred_fallthru
        _
      // Predicated region
      $region17: #{tpu_custom_call.1} parent=11 // pred_check
        %p209 = pneg %p81
      $region18: #{tpu_custom_call.1} parent=11 // pred_check_branch
        %211 = sbr.rel (%p209) target = $region20
      $region19: #{tpu_custom_call.1} parent=11 // pred_region
        _
      $region20: #{tpu_custom_call.1} parent=11 // pred_fallthru
        _
      // Predicated region
      $region21: #{tpu_custom_call.1} parent=11 // pred_check
        %p212 = pneg %p102
      $region22: #{tpu_custom_call.1} parent=11 // pred_check_branch
        %214 = sbr.rel (%p212) target = $region24
      $region23: #{tpu_custom_call.1} parent=11 // pred_region
        _
      $region24: #{tpu_custom_call.1} parent=11 // pred_fallthru
        _
      // Predicated region
      $region25: #{tpu_custom_call.1} parent=11 // pred_check
        %p215 = pneg %p123
      $region26: #{tpu_custom_call.1} parent=11 // pred_check_branch
        %217 = sbr.rel (%p215) target = $region28
      $region27: #{tpu_custom_call.1} parent=11 // pred_region
        _
      $region28: #{tpu_custom_call.1} parent=11 // pred_fallthru
        _
      // Predicated region
      $region29: #{tpu_custom_call.1} parent=11 // pred_check
        %p218 = pneg %p144
      $region30: #{tpu_custom_call.1} parent=11 // pred_check_branch
        %220 = sbr.rel (%p218) target = $region32
      $region31: #{tpu_custom_call.1} parent=11 // pred_region
        _
      $region32: #{tpu_custom_call.1} parent=11 // pred_fallthru
        _
      // Predicated region
      $region33: #{tpu_custom_call.1} parent=11 // pred_check
        %p221 = pneg %p165
      $region34: #{tpu_custom_call.1} parent=11 // pred_check_branch
        %223 = sbr.rel (%p221) target = $region36
      $region35: #{tpu_custom_call.1} parent=11 // pred_region
        _
      $region36: #{tpu_custom_call.1} parent=11 // pred_fallthru
        _
    $region12: #{tpu_custom_call.1} parent=5 // pred_fallthru
      _
    %p224 = scmp.lt.s32.totalorder %s13, 2
    // Predicated region
    $region37: #{tpu_custom_call.1} parent=5 // pred_check
      %p225 = pneg %p224
    $region38: #{tpu_custom_call.1} parent=5 // pred_check_branch
      %227 = sbr.rel (%p225) target = $region40
    $region39: #{tpu_custom_call.1} parent=5 // pred_region
      // Predicated region
      $region41: #{tpu_custom_call.1} parent=39 // pred_check
        %p228 = pneg %p33
      $region42: #{tpu_custom_call.1} parent=39 // pred_check_branch
        %230 = sbr.rel (%p228) target = $region44
      $region43: #{tpu_custom_call.1} parent=39 // pred_region
        %s231 = smul.u32 19, %s13
        %p232 = scmp.lt.s32.totalorder %s231, 37
        %s233 = scalar_select %p232, %s231, 37
        %s234 = smul.addr %s233, 8
        %s235 = scalar_lea.vmem %s0, %s234
        %s236 = smul.u32 19, %s13
      $region44: #{tpu_custom_call.1} parent=39 // pred_fallthru
        _
    $region40: #{tpu_custom_call.1} parent=5 // pred_fallthru
      _
    %p237 = scmp.le.s32.totalorder 1, %s13
    %p238 = scmp.lt.s32.totalorder %s13, 3
    %p239 = pnand %p237, %p238
    %p240 = pneg %p239
    // Predicated region
    $region45: #{tpu_custom_call.1} parent=5 // pred_check
      _
    $region46: #{tpu_custom_call.1} parent=5 // pred_check_branch
      %242 = sbr.rel (%p239) target = $region48
    $region47: #{tpu_custom_call.1} parent=5 // pred_region
      %s243 = ssub.s32 %s13, 1
      %s244 = smul.u32 19, %s18
      %p245 = scmp.lt.s32.totalorder %s244, 37
      %s246 = scalar_select %p245, %s244, 37
      %s247 = smul.addr %s246, 8
      %s248 = scalar_lea.vmem %s0, %s247
      %p249 = pneg %p39
      %p250 = pneg %p36
      %p251 = pneg %p60
      %p252 = pneg %p57
      %p253 = pneg %p81
      %p254 = pneg %p78
      %p255 = pneg %p102
      %p256 = pneg %p99
      %p257 = pneg %p123
      %p258 = pneg %p120
      %p259 = pneg %p144
      %p260 = pneg %p141
      %p261 = pneg %p165
      %p262 = pneg %p162
      %p263 = pneg %p191
      %p264 = pneg %p188
      %s265 = smul.u32 19, %s18
      %p266 = scmp.lt.s32.totalorder %s265, 37
      %s267 = scalar_select %p266, %s265, 37
      %s268 = smul.addr %s267, 8
      %s269 = scalar_lea.vmem %s7, %s268
      %s270 = smul.u32 19, %s18
      %p271 = scmp.lt.s32.totalorder %s270, 37
      %s272 = scalar_select %p271, %s270, 37
      %s273 = smul.addr %s272, 8
      %s274 = scalar_lea.vmem %s0, %s273
      %s275 = smul.u32 19, %s18
      %s276 = smul.u32 19, %s18
      %p277 = scmp.lt.s32.totalorder %s276, 37
      %s278 = scalar_select %p277, %s276, 37
      %s279 = smul.addr %s278, 8
      %s280 = scalar_lea.vmem %s7, %s279
      %s281 = smul.u32 19, %s18
      %v282 = vld [vmem:[%s274] sm:$0xff]
      %v283 = vld [vmem:[%s274 + $0x8] sm:$0xff]
      %v284 = vld [vmem:[%s274 + $0x10] sm:$0xff]
      %v285 = vld [vmem:[%s274 + $0x18] sm:$0xff]
      %v286 = vld [vmem:[%s274 + $0x20] sm:$0xff]
      %v287 = vld [vmem:[%s274 + $0x28] sm:$0xff]
      %v288 = vld [vmem:[%s274 + $0x30] sm:$0xff]
      %v289 = vld [vmem:[%s274 + $0x38] sm:$0xff]
      %v290 = vld [vmem:[%s274 + $0x40] sm:$0xff]
      %v291 = vld [vmem:[%s274 + $0x48] sm:$0xff]
      %v292 = vld [vmem:[%s274 + $0x50] sm:$0xff]
      %v293 = vld [vmem:[%s274 + $0x58] sm:$0xff]
      %v294 = vld [vmem:[%s274 + $0x60] sm:$0xff]
      %v295 = vld [vmem:[%s274 + $0x68] sm:$0xff]
      %v296 = vld [vmem:[%s274 + $0x70] sm:$0xff]
      %v297 = vld [vmem:[%s274 + $0x78] sm:$0xff]
      %v298 = vld [vmem:[%s274 + $0x80] sm:$0xff]
      %v299 = vld [vmem:[%s274 + $0x88] sm:$0xff]
      %v300 = vld [vmem:[%s274 + $0x90] sm:$0xff]
      %v301 = vld [vmem:[%s1] sm:$0x3f]
      %v302 = vld [vmem:[%s2] sm:$0x1]
      %v304 = vlaneseq
      %v305 = vshrl.u32 %v304, 7
      %v306 = vsub.s32 0, %v305
      %v307 = vrot.slane %v302, %v306
      %vm309 = vcmask 48128
      %v311 = vsel %vm309, %v282, 0
      %v314 = vsel %vm309, %v283, 0
      %v317 = vsel %vm309, %v284, 0
      %v320 = vsel %vm309, %v285, 0
      %v323 = vsel %vm309, %v286, 0
      %v326 = vsel %vm309, %v287, 0
      %v329 = vsel %vm309, %v288, 0
      %v332 = vsel %vm309, %v289, 0
      %v335 = vsel %vm309, %v290, 0
      %v338 = vsel %vm309, %v291, 0
      %v341 = vsel %vm309, %v292, 0
      %v344 = vsel %vm309, %v293, 0
      %v347 = vsel %vm309, %v294, 0
      %v350 = vsel %vm309, %v295, 0
      %v353 = vsel %vm309, %v296, 0
      %v356 = vsel %vm309, %v297, 0
      %v359 = vsel %vm309, %v298, 0
      %v362 = vsel %vm309, %v299, 0
      %v365 = vsel %vm309, %v300, 0
      %vm367 = vcmask 1045504
      %v369 = vsel %vm367, %v301, 0
      %371 = vmatprep.subr.mxu0 0.0
      %372 = vmatpush1.msra.mxu0 %v369
      %373 = vmatprep.subr.mxu0 0.0
      %374 = vmatpush1.msra.mxu0 0.0
      %375 = vmatprep.subr.mxu0 0.0
      %376 = vmatpush1.msra.mxu0 0.0
      %377 = vmatprep.subr.mxu0 0.0
      %378 = vmatpush1.msra.mxu0 0.0
      %379 = vmatprep.subr.mxu0 0.0
      %380 = vmatpush1.msra.mxu0 0.0
      %381 = vmatprep.subr.mxu0 0.0
      %382 = vmatpush1.msra.mxu0 0.0
      %383 = vmatprep.subr.mxu0 0.0
      %384 = vmatpush1.msra.mxu0 0.0
      %385 = vmatprep.subr.mxu0 0.0
      %386 = vmatpush1.msra.mxu0 0.0
      %387 = vmatprep.subr.mxu0 0.0
      %388 = vmatpush1.msra.mxu0 0.0
      %389 = vmatprep.subr.mxu0 0.0
      %390 = vmatpush1.msra.mxu0 0.0
      %391 = vmatprep.subr.mxu0 0.0
      %392 = vmatpush1.msra.mxu0 0.0
      %393 = vmatprep.subr.mxu0 0.0
      %394 = vmatpush1.msra.mxu0 0.0
      %395 = vmatprep.subr.mxu0 0.0
      %396 = vmatpush1.msra.mxu0 0.0
      %397 = vmatprep.subr.mxu0 0.0
      %398 = vmatpush1.msra.mxu0 0.0
      %399 = vmatprep.subr.mxu0 0.0
      %400 = vmatpush1.msra.mxu0 0.0
      %401 = vmatprep.subr.mxu0 0.0
      %402 = vmatpush1.msra.mxu0 0.0
      %403 = vmatprep.subr.mxu0 0.0
      %404 = vmatpush1.msra.mxu0 0.0
      %405 = vmatprep.subr.mxu0 0.0
      %406 = vmatpush1.msra.mxu0 0.0
      %407 = vmatprep.subr.mxu0 0.0
      %408 = vmatpush1.msra.mxu0 0.0
      %409 = vmatprep.subr.mxu0 0.0
      %410 = vmatpush1.msra.mxu0 0.0
      %411 = vmatprep.subr.mxu0 0.0
      %412 = vmatpush1.msra.mxu0 0.0
      %413 = vmatprep.subr.mxu0 0.0
      %414 = vmatpush1.msra.mxu0 0.0
      %415 = vmatprep.subr.mxu0 0.0
      %416 = vmatpush1.msra.mxu0 0.0
      %417 = vmatprep.subr.mxu0 0.0
      %418 = vmatpush1.msra.mxu0 0.0
      %419 = vmatprep.subr.mxu0 0.0
      %420 = vmatpush1.msra.mxu0 0.0
      %421 = vmatprep.subr.mxu0 0.0
      %422 = vmatpush1.msra.mxu0 0.0
      %423 = vmatprep.subr.mxu0 0.0
      %424 = vmatpush1.msra.mxu0 0.0
      %425 = vmatprep.subr.mxu0 0.0
      %426 = vmatpush1.msra.mxu0 0.0
      %427 = vmatprep.subr.mxu0 0.0
      %428 = vmatpush1.msra.mxu0 0.0
      %429 = vmatprep.subr.mxu0 0.0
      %430 = vmatpush1.msra.mxu0 0.0
      %431 = vmatprep.subr.mxu0 0.0
      %432 = vmatpush1.msra.mxu0 0.0
      %433 = vmatprep.subr.mxu0 0.0
      %434 = vmatpush1.msra.mxu0 0.0
      %435 = vmatprep.mubr.f32.mxu0 0.0
      %436 = vmatmul.mubr.f32.gmra.mrb[0].mxu0 %v311
      %v437 = vpop.f32.mrb[0].mxu0
      %v438 = vadd.f32 %v307, %v437
      %v439 = vpop.f32.mrb[0].mxu0
      %440 = vmatprep.mubr.f32.mxu0 0.0
      %441 = vmatmul.mubr.f32.gmra.mrb[0].mxu0 %v314
      %v442 = vpop.f32.mrb[0].mxu0
      %v443 = vadd.f32 %v307, %v442
      %v444 = vpop.f32.mrb[0].mxu0
      %445 = vmatprep.mubr.f32.mxu0 0.0
      %446 = vmatmul.mubr.f32.gmra.mrb[0].mxu0 %v317
      %v447 = vpop.f32.mrb[0].mxu0
      %v448 = vadd.f32 %v307, %v447
      %v449 = vpop.f32.mrb[0].mxu0
      %450 = vmatprep.mubr.f32.mxu0 0.0
      %451 = vmatmul.mubr.f32.gmra.mrb[0].mxu0 %v320
      %v452 = vpop.f32.mrb[0].mxu0
      %v453 = vadd.f32 %v307, %v452
      %v454 = vpop.f32.mrb[0].mxu0
      %455 = vmatprep.mubr.f32.mxu0 0.0
      %456 = vmatmul.mubr.f32.gmra.mrb[0].mxu0 %v323
      %v457 = vpop.f32.mrb[0].mxu0
      %v458 = vadd.f32 %v307, %v457
      %v459 = vpop.f32.mrb[0].mxu0
      %460 = vmatprep.mubr.f32.mxu0 0.0
      %461 = vmatmul.mubr.f32.gmra.mrb[0].mxu0 %v326
      %v462 = vpop.f32.mrb[0].mxu0
      %v463 = vadd.f32 %v307, %v462
      %v464 = vpop.f32.mrb[0].mxu0
      %465 = vmatprep.mubr.f32.mxu0 0.0
      %466 = vmatmul.mubr.f32.gmra.mrb[0].mxu0 %v329
      %v467 = vpop.f32.mrb[0].mxu0
      %v468 = vadd.f32 %v307, %v467
      %v469 = vpop.f32.mrb[0].mxu0
      %470 = vmatprep.mubr.f32.mxu0 0.0
      %471 = vmatmul.mubr.f32.gmra.mrb[0].mxu0 %v332
      %v472 = vpop.f32.mrb[0].mxu0
      %v473 = vadd.f32 %v307, %v472
      %v474 = vpop.f32.mrb[0].mxu0
      %475 = vmatprep.mubr.f32.mxu0 0.0
      %476 = vmatmul.mubr.f32.gmra.mrb[0].mxu0 %v335
      %v477 = vpop.f32.mrb[0].mxu0
      %v478 = vadd.f32 %v307, %v477
      %v479 = vpop.f32.mrb[0].mxu0
      %480 = vmatprep.mubr.f32.mxu0 0.0
      %481 = vmatmul.mubr.f32.gmra.mrb[0].mxu0 %v338
      %v482 = vpop.f32.mrb[0].mxu0
      %v483 = vadd.f32 %v307, %v482
      %v484 = vpop.f32.mrb[0].mxu0
      %485 = vmatprep.mubr.f32.mxu0 0.0
      %486 = vmatmul.mubr.f32.gmra.mrb[0].mxu0 %v341
      %v487 = vpop.f32.mrb[0].mxu0
      %v488 = vadd.f32 %v307, %v487
      %v489 = vpop.f32.mrb[0].mxu0
      %490 = vmatprep.mubr.f32.mxu0 0.0
      %491 = vmatmul.mubr.f32.gmra.mrb[0].mxu0 %v344
      %v492 = vpop.f32.mrb[0].mxu0
      %v493 = vadd.f32 %v307, %v492
      %v494 = vpop.f32.mrb[0].mxu0
      %495 = vmatprep.mubr.f32.mxu0 0.0
      %496 = vmatmul.mubr.f32.gmra.mrb[0].mxu0 %v347
      %v497 = vpop.f32.mrb[0].mxu0
      %v498 = vadd.f32 %v307, %v497
      %v499 = vpop.f32.mrb[0].mxu0
      %500 = vmatprep.mubr.f32.mxu0 0.0
      %501 = vmatmul.mubr.f32.gmra.mrb[0].mxu0 %v350
      %v502 = vpop.f32.mrb[0].mxu0
      %v503 = vadd.f32 %v307, %v502
      %v504 = vpop.f32.mrb[0].mxu0
      %505 = vmatprep.mubr.f32.mxu0 0.0
      %506 = vmatmul.mubr.f32.gmra.mrb[0].mxu0 %v353
      %v507 = vpop.f32.mrb[0].mxu0
      %v508 = vadd.f32 %v307, %v507
      %v509 = vpop.f32.mrb[0].mxu0
      %510 = vmatprep.mubr.f32.mxu0 0.0
      %511 = vmatmul.mubr.f32.gmra.mrb[0].mxu0 %v356
      %v512 = vpop.f32.mrb[0].mxu0
      %v513 = vadd.f32 %v307, %v512
      %v514 = vpop.f32.mrb[0].mxu0
      %515 = vmatprep.mubr.f32.mxu0 0.0
      %516 = vmatmul.mubr.f32.gmra.mrb[0].mxu0 %v359
      %v517 = vpop.f32.mrb[0].mxu0
      %v518 = vadd.f32 %v307, %v517
      %v519 = vpop.f32.mrb[0].mxu0
      %520 = vmatprep.mubr.f32.mxu0 0.0
      %521 = vmatmul.mubr.f32.gmra.mrb[0].mxu0 %v362
      %v522 = vpop.f32.mrb[0].mxu0
      %v523 = vadd.f32 %v307, %v522
      %v524 = vpop.f32.mrb[0].mxu0
      %525 = vmatprep.mubr.f32.mxu0 0.0
      %526 = vmatmul.mubr.f32.gmra.mrb[0].mxu0 %v365
      %v527 = vpop.f32.mrb[0].mxu0
      %v528 = vadd.f32 %v307, %v527
      %v529 = vpop.f32.mrb[0].mxu0
      %530 = vdwg.mxu0
      %v531 = vmax.f32 %v438, 0.0
      %v532 = vmax.f32 %v443, 0.0
      %v533 = vmax.f32 %v448, 0.0
      %v534 = vmax.f32 %v453, 0.0
      %v535 = vmax.f32 %v458, 0.0
      %v536 = vmax.f32 %v463, 0.0
      %v537 = vmax.f32 %v468, 0.0
      %v538 = vmax.f32 %v473, 0.0
      %v539 = vmax.f32 %v478, 0.0
      %v540 = vmax.f32 %v483, 0.0
      %v541 = vmax.f32 %v488, 0.0
      %v542 = vmax.f32 %v493, 0.0
      %v543 = vmax.f32 %v498, 0.0
      %v544 = vmax.f32 %v503, 0.0
      %v545 = vmax.f32 %v508, 0.0
      %v546 = vmax.f32 %v513, 0.0
      %v547 = vmax.f32 %v518, 0.0
      %v548 = vmax.f32 %v523, 0.0
      %v549 = vmax.f32 %v528, 0.0
      %v550 = vld [vmem:[%s3] sm:$0xff]
      %v551 = vld [vmem:[%s3 + $0x8] sm:$0xff]
      %v552 = vld [vmem:[%s3 + $0x10] sm:$0xff]
      %v553 = vld [vmem:[%s3 + $0x18] sm:$0xff]
      %v554 = vld [vmem:[%s3 + $0x20] sm:$0xff]
      %v555 = vld [vmem:[%s3 + $0x28] sm:$0xff]
      %v556 = vld [vmem:[%s3 + $0x30] sm:$0xff]
      %v557 = vld [vmem:[%s3 + $0x38] sm:$0xff]
      %v558 = vld [vmem:[%s3 + $0x40] sm:$0xff]
      %v559 = vld [vmem:[%s3 + $0x48] sm:$0xff]
      %v560 = vld [vmem:[%s3 + $0x50] sm:$0xff]
      %v561 = vld [vmem:[%s3 + $0x58] sm:$0xff]
      %v562 = vld [vmem:[%s3 + $0x60] sm:$0xff]
      %v563 = vld [vmem:[%s3 + $0x68] sm:$0xff]
      %v564 = vld [vmem:[%s3 + $0x70] sm:$0xff]
      %v565 = vld [vmem:[%s3 + $0x78] sm:$0xff]
      %v566 = vld [vmem:[%s4] sm:$0x1]
      %v568 = vlaneseq
      %v569 = vshrl.u32 %v568, 7
      %v570 = vsub.s32 0, %v569
      %v571 = vrot.slane %v566, %v570
      %573 = vmatprep.subr.mxu0 0.0
      %574 = vmatpush1.msra.mxu0 %v550
      %575 = vmatprep.subr.mxu0 0.0
      %576 = vmatpush1.msra.mxu0 %v551
      %577 = vmatprep.subr.mxu0 0.0
      %578 = vmatpush1.msra.mxu0 %v552
      %579 = vmatprep.subr.mxu0 0.0
      %580 = vmatpush1.msra.mxu0 %v553
      %581 = vmatprep.subr.mxu0 0.0
      %582 = vmatpush1.msra.mxu0 %v554
      %583 = vmatprep.subr.mxu0 0.0
      %584 = vmatpush1.msra.mxu0 %v555
      %585 = vmatprep.subr.mxu0 0.0
      %586 = vmatpush1.msra.mxu0 %v556
      %587 = vmatprep.subr.mxu0 0.0
      %588 = vmatpush1.msra.mxu0 %v557
      %589 = vmatprep.subr.mxu0 0.0
      %590 = vmatpush1.msra.mxu0 %v558
      %591 = vmatprep.subr.mxu0 0.0
      %592 = vmatpush1.msra.mxu0 %v559
      %593 = vmatprep.subr.mxu0 0.0
      %594 = vmatpush1.msra.mxu0 %v560
      %595 = vmatprep.subr.mxu0 0.0
      %596 = vmatpush1.msra.mxu0 %v561
      %597 = vmatprep.subr.mxu0 0.0
      %598 = vmatpush1.msra.mxu0 %v562
      %599 = vmatprep.subr.mxu0 0.0
      %600 = vmatpush1.msra.mxu0 %v563
      %601 = vmatprep.subr.mxu0 0.0
      %602 = vmatpush1.msra.mxu0 %v564
      %603 = vmatprep.subr.mxu0 0.0
      %604 = vmatpush1.msra.mxu0 %v565
      %605 = vmatprep.subr.mxu0 0.0
      %606 = vmatpush1.msra.mxu0 0.0
      %607 = vmatprep.subr.mxu0 0.0
      %608 = vmatpush1.msra.mxu0 0.0
      %609 = vmatprep.subr.mxu0 0.0
      %610 = vmatpush1.msra.mxu0 0.0
      %611 = vmatprep.subr.mxu0 0.0
      %612 = vmatpush1.msra.mxu0 0.0
      %613 = vmatprep.subr.mxu0 0.0
      %614 = vmatpush1.msra.mxu0 0.0
      %615 = vmatprep.subr.mxu0 0.0
      %616 = vmatpush1.msra.mxu0 0.0
      %617 = vmatprep.subr.mxu0 0.0
      %618 = vmatpush1.msra.mxu0 0.0
      %619 = vmatprep.subr.mxu0 0.0
      %620 = vmatpush1.msra.mxu0 0.0
      %621 = vmatprep.subr.mxu0 0.0
      %622 = vmatpush1.msra.mxu0 0.0
      %623 = vmatprep.subr.mxu0 0.0
      %624 = vmatpush1.msra.mxu0 0.0
      %625 = vmatprep.subr.mxu0 0.0
      %626 = vmatpush1.msra.mxu0 0.0
      %627 = vmatprep.subr.mxu0 0.0
      %628 = vmatpush1.msra.mxu0 0.0
      %629 = vmatprep.subr.mxu0 0.0
      %630 = vmatpush1.msra.mxu0 0.0
      %631 = vmatprep.subr.mxu0 0.0
      %632 = vmatpush1.msra.mxu0 0.0
      %633 = vmatprep.subr.mxu0 0.0
      %634 = vmatpush1.msra.mxu0 0.0
      %635 = vmatprep.subr.mxu0 0.0
      %636 = vmatpush1.msra.mxu0 0.0
      %637 = vmatprep.mubr.f32.mxu0 0.0
      %638 = vmatmul.mubr.f32.gmra.mrb[0].mxu0 %v531
      %v639 = vpop.f32.mrb[0].mxu0
      %v640 = vadd.f32 %v571, %v639
      %v641 = vpop.f32.mrb[0].mxu0
      %642 = vmatprep.mubr.f32.mxu0 0.0
      %643 = vmatmul.mubr.f32.gmra.mrb[0].mxu0 %v532
      %v644 = vpop.f32.mrb[0].mxu0
      %v645 = vadd.f32 %v571, %v644
      %v646 = vpop.f32.mrb[0].mxu0
      %647 = vmatprep.mubr.f32.mxu0 0.0
      %648 = vmatmul.mubr.f32.gmra.mrb[0].mxu0 %v533
      %v649 = vpop.f32.mrb[0].mxu0
      %v650 = vadd.f32 %v571, %v649
      %v651 = vpop.f32.mrb[0].mxu0
      %652 = vmatprep.mubr.f32.mxu0 0.0
      %653 = vmatmul.mubr.f32.gmra.mrb[0].mxu0 %v534
      %v654 = vpop.f32.mrb[0].mxu0
      %v655 = vadd.f32 %v571, %v654
      %v656 = vpop.f32.mrb[0].mxu0
      %657 = vmatprep.mubr.f32.mxu0 0.0
      %658 = vmatmul.mubr.f32.gmra.mrb[0].mxu0 %v535
      %v659 = vpop.f32.mrb[0].mxu0
      %v660 = vadd.f32 %v571, %v659
      %v661 = vpop.f32.mrb[0].mxu0
      %662 = vmatprep.mubr.f32.mxu0 0.0
      %663 = vmatmul.mubr.f32.gmra.mrb[0].mxu0 %v536
      %v664 = vpop.f32.mrb[0].mxu0
      %v665 = vadd.f32 %v571, %v664
      %v666 = vpop.f32.mrb[0].mxu0
      %667 = vmatprep.mubr.f32.mxu0 0.0
      %668 = vmatmul.mubr.f32.gmra.mrb[0].mxu0 %v537
      %v669 = vpop.f32.mrb[0].mxu0
      %v670 = vadd.f32 %v571, %v669
      %v671 = vpop.f32.mrb[0].mxu0
      %672 = vmatprep.mubr.f32.mxu0 0.0
      %673 = vmatmul.mubr.f32.gmra.mrb[0].mxu0 %v538
      %v674 = vpop.f32.mrb[0].mxu0
      %v675 = vadd.f32 %v571, %v674
      %v676 = vpop.f32.mrb[0].mxu0
      %677 = vmatprep.mubr.f32.mxu0 0.0
      %678 = vmatmul.mubr.f32.gmra.mrb[0].mxu0 %v539
      %v679 = vpop.f32.mrb[0].mxu0
      %v680 = vadd.f32 %v571, %v679
      %v681 = vpop.f32.mrb[0].mxu0
      %682 = vmatprep.mubr.f32.mxu0 0.0
      %683 = vmatmul.mubr.f32.gmra.mrb[0].mxu0 %v540
      %v684 = vpop.f32.mrb[0].mxu0
      %v685 = vadd.f32 %v571, %v684
      %v686 = vpop.f32.mrb[0].mxu0
      %687 = vmatprep.mubr.f32.mxu0 0.0
      %688 = vmatmul.mubr.f32.gmra.mrb[0].mxu0 %v541
      %v689 = vpop.f32.mrb[0].mxu0
      %v690 = vadd.f32 %v571, %v689
      %v691 = vpop.f32.mrb[0].mxu0
      %692 = vmatprep.mubr.f32.mxu0 0.0
      %693 = vmatmul.mubr.f32.gmra.mrb[0].mxu0 %v542
      %v694 = vpop.f32.mrb[0].mxu0
      %v695 = vadd.f32 %v571, %v694
      %v696 = vpop.f32.mrb[0].mxu0
      %697 = vmatprep.mubr.f32.mxu0 0.0
      %698 = vmatmul.mubr.f32.gmra.mrb[0].mxu0 %v543
      %v699 = vpop.f32.mrb[0].mxu0
      %v700 = vadd.f32 %v571, %v699
      %v701 = vpop.f32.mrb[0].mxu0
      %702 = vmatprep.mubr.f32.mxu0 0.0
      %703 = vmatmul.mubr.f32.gmra.mrb[0].mxu0 %v544
      %v704 = vpop.f32.mrb[0].mxu0
      %v705 = vadd.f32 %v571, %v704
      %v706 = vpop.f32.mrb[0].mxu0
      %707 = vmatprep.mubr.f32.mxu0 0.0
      %708 = vmatmul.mubr.f32.gmra.mrb[0].mxu0 %v545
      %v709 = vpop.f32.mrb[0].mxu0
      %v710 = vadd.f32 %v571, %v709
      %v711 = vpop.f32.mrb[0].mxu0
      %712 = vmatprep.mubr.f32.mxu0 0.0
      %713 = vmatmul.mubr.f32.gmra.mrb[0].mxu0 %v546
      %v714 = vpop.f32.mrb[0].mxu0
      %v715 = vadd.f32 %v571, %v714
      %v716 = vpop.f32.mrb[0].mxu0
      %717 = vmatprep.mubr.f32.mxu0 0.0
      %718 = vmatmul.mubr.f32.gmra.mrb[0].mxu0 %v547
      %v719 = vpop.f32.mrb[0].mxu0
      %v720 = vadd.f32 %v571, %v719
      %v721 = vpop.f32.mrb[0].mxu0
      %722 = vmatprep.mubr.f32.mxu0 0.0
      %723 = vmatmul.mubr.f32.gmra.mrb[0].mxu0 %v548
      %v724 = vpop.f32.mrb[0].mxu0
      %v725 = vadd.f32 %v571, %v724
      %v726 = vpop.f32.mrb[0].mxu0
      %727 = vmatprep.mubr.f32.mxu0 0.0
      %728 = vmatmul.mubr.f32.gmra.mrb[0].mxu0 %v549
      %v729 = vpop.f32.mrb[0].mxu0
      %v730 = vadd.f32 %v571, %v729
      %v731 = vpop.f32.mrb[0].mxu0
      %732 = vdwg.mxu0
      %v733 = vmax.f32 %v640, 0.0
      %v734 = vmax.f32 %v645, 0.0
      %v735 = vmax.f32 %v650, 0.0
      %v736 = vmax.f32 %v655, 0.0
      %v737 = vmax.f32 %v660, 0.0
      %v738 = vmax.f32 %v665, 0.0
      %v739 = vmax.f32 %v670, 0.0
      %v740 = vmax.f32 %v675, 0.0
      %v741 = vmax.f32 %v680, 0.0
      %v742 = vmax.f32 %v685, 0.0
      %v743 = vmax.f32 %v690, 0.0
      %v744 = vmax.f32 %v695, 0.0
      %v745 = vmax.f32 %v700, 0.0
      %v746 = vmax.f32 %v705, 0.0
      %v747 = vmax.f32 %v710, 0.0
      %v748 = vmax.f32 %v715, 0.0
      %v749 = vmax.f32 %v720, 0.0
      %v750 = vmax.f32 %v725, 0.0
      %v751 = vmax.f32 %v730, 0.0
      %v752 = vld [vmem:[%s5] sm:$0xff]
      %v753 = vld [vmem:[%s5 + $0x8] sm:$0xff]
      %v754 = vld [vmem:[%s5 + $0x10] sm:$0xff]
      %v755 = vld [vmem:[%s5 + $0x18] sm:$0xff]
      %v756 = vld [vmem:[%s5 + $0x20] sm:$0xff]
      %v757 = vld [vmem:[%s5 + $0x28] sm:$0xff]
      %v758 = vld [vmem:[%s5 + $0x30] sm:$0xff]
      %v759 = vld [vmem:[%s5 + $0x38] sm:$0xff]
      %v760 = vld [vmem:[%s5 + $0x40] sm:$0xff]
      %v761 = vld [vmem:[%s5 + $0x48] sm:$0xff]
      %v762 = vld [vmem:[%s5 + $0x50] sm:$0xff]
      %v763 = vld [vmem:[%s5 + $0x58] sm:$0xff]
      %v764 = vld [vmem:[%s5 + $0x60] sm:$0xff]
      %v765 = vld [vmem:[%s5 + $0x68] sm:$0xff]
      %v766 = vld [vmem:[%s5 + $0x70] sm:$0xff]
      %v767 = vld [vmem:[%s5 + $0x78] sm:$0xff]
      %v768 = vld [vmem:[%s6] sm:$0x1]
      %v770 = vlaneseq
      %v771 = vshrl.u32 %v770, 7
      %v772 = vsub.s32 0, %v771
      %v773 = vrot.slane %v768, %v772
      %775 = vmatprep.subr.mxu0 0.0
      %776 = vmatpush1.msra.mxu0 %v752
      %777 = vmatprep.subr.mxu0 0.0
      %778 = vmatpush1.msra.mxu0 %v753
      %779 = vmatprep.subr.mxu0 0.0
      %780 = vmatpush1.msra.mxu0 %v754
      %781 = vmatprep.subr.mxu0 0.0
      %782 = vmatpush1.msra.mxu0 %v755
      %783 = vmatprep.subr.mxu0 0.0
      %784 = vmatpush1.msra.mxu0 %v756
      %785 = vmatprep.subr.mxu0 0.0
      %786 = vmatpush1.msra.mxu0 %v757
      %787 = vmatprep.subr.mxu0 0.0
      %788 = vmatpush1.msra.mxu0 %v758
      %789 = vmatprep.subr.mxu0 0.0
      %790 = vmatpush1.msra.mxu0 %v759
      %791 = vmatprep.subr.mxu0 0.0
      %792 = vmatpush1.msra.mxu0 %v760
      %793 = vmatprep.subr.mxu0 0.0
      %794 = vmatpush1.msra.mxu0 %v761
      %795 = vmatprep.subr.mxu0 0.0
      %796 = vmatpush1.msra.mxu0 %v762
      %797 = vmatprep.subr.mxu0 0.0
      %798 = vmatpush1.msra.mxu0 %v763
      %799 = vmatprep.subr.mxu0 0.0
      %800 = vmatpush1.msra.mxu0 %v764
      %801 = vmatprep.subr.mxu0 0.0
      %802 = vmatpush1.msra.mxu0 %v765
      %803 = vmatprep.subr.mxu0 0.0
      %804 = vmatpush1.msra.mxu0 %v766
      %805 = vmatprep.subr.mxu0 0.0
      %806 = vmatpush1.msra.mxu0 %v767
      %807 = vmatprep.subr.mxu0 0.0
      %808 = vmatpush1.msra.mxu0 0.0
      %809 = vmatprep.subr.mxu0 0.0
      %810 = vmatpush1.msra.mxu0 0.0
      %811 = vmatprep.subr.mxu0 0.0
      %812 = vmatpush1.msra.mxu0 0.0
      %813 = vmatprep.subr.mxu0 0.0
      %814 = vmatpush1.msra.mxu0 0.0
      %815 = vmatprep.subr.mxu0 0.0
      %816 = vmatpush1.msra.mxu0 0.0
      %817 = vmatprep.subr.mxu0 0.0
      %818 = vmatpush1.msra.mxu0 0.0
      %819 = vmatprep.subr.mxu0 0.0
      %820 = vmatpush1.msra.mxu0 0.0
      %821 = vmatprep.subr.mxu0 0.0
      %822 = vmatpush1.msra.mxu0 0.0
      %823 = vmatprep.subr.mxu0 0.0
      %824 = vmatpush1.msra.mxu0 0.0
      %825 = vmatprep.subr.mxu0 0.0
      %826 = vmatpush1.msra.mxu0 0.0
      %827 = vmatprep.subr.mxu0 0.0
      %828 = vmatpush1.msra.mxu0 0.0
      %829 = vmatprep.subr.mxu0 0.0
      %830 = vmatpush1.msra.mxu0 0.0
      %831 = vmatprep.subr.mxu0 0.0
      %832 = vmatpush1.msra.mxu0 0.0
      %833 = vmatprep.subr.mxu0 0.0
      %834 = vmatpush1.msra.mxu0 0.0
      %835 = vmatprep.subr.mxu0 0.0
      %836 = vmatpush1.msra.mxu0 0.0
      %837 = vmatprep.subr.mxu0 0.0
      %838 = vmatpush1.msra.mxu0 0.0
      %839 = vmatprep.mubr.f32.mxu0 0.0
      %840 = vmatmul.mubr.f32.gmra.mrb[0].mxu0 %v733
      %v841 = vpop.f32.mrb[0].mxu0
      %v842 = vadd.f32 %v773, %v841
      %v843 = vpop.f32.mrb[0].mxu0
      %844 = vmatprep.mubr.f32.mxu0 0.0
      %845 = vmatmul.mubr.f32.gmra.mrb[0].mxu0 %v734
      %v846 = vpop.f32.mrb[0].mxu0
      %v847 = vadd.f32 %v773, %v846
      %v848 = vpop.f32.mrb[0].mxu0
      %849 = vmatprep.mubr.f32.mxu0 0.0
      %850 = vmatmul.mubr.f32.gmra.mrb[0].mxu0 %v735
      %v851 = vpop.f32.mrb[0].mxu0
      %v852 = vadd.f32 %v773, %v851
      %v853 = vpop.f32.mrb[0].mxu0
      %854 = vmatprep.mubr.f32.mxu0 0.0
      %855 = vmatmul.mubr.f32.gmra.mrb[0].mxu0 %v736
      %v856 = vpop.f32.mrb[0].mxu0
      %v857 = vadd.f32 %v773, %v856
      %v858 = vpop.f32.mrb[0].mxu0
      %859 = vmatprep.mubr.f32.mxu0 0.0
      %860 = vmatmul.mubr.f32.gmra.mrb[0].mxu0 %v737
      %v861 = vpop.f32.mrb[0].mxu0
      %v862 = vadd.f32 %v773, %v861
      %v863 = vpop.f32.mrb[0].mxu0
      %864 = vmatprep.mubr.f32.mxu0 0.0
      %865 = vmatmul.mubr.f32.gmra.mrb[0].mxu0 %v738
      %v866 = vpop.f32.mrb[0].mxu0
      %v867 = vadd.f32 %v773, %v866
      %v868 = vpop.f32.mrb[0].mxu0
      %869 = vmatprep.mubr.f32.mxu0 0.0
      %870 = vmatmul.mubr.f32.gmra.mrb[0].mxu0 %v739
      %v871 = vpop.f32.mrb[0].mxu0
      %v872 = vadd.f32 %v773, %v871
      %v873 = vpop.f32.mrb[0].mxu0
      %874 = vmatprep.mubr.f32.mxu0 0.0
      %875 = vmatmul.mubr.f32.gmra.mrb[0].mxu0 %v740
      %v876 = vpop.f32.mrb[0].mxu0
      %v877 = vadd.f32 %v773, %v876
      %v878 = vpop.f32.mrb[0].mxu0
      %879 = vmatprep.mubr.f32.mxu0 0.0
      %880 = vmatmul.mubr.f32.gmra.mrb[0].mxu0 %v741
      %v881 = vpop.f32.mrb[0].mxu0
      %v882 = vadd.f32 %v773, %v881
      %v883 = vpop.f32.mrb[0].mxu0
      %884 = vmatprep.mubr.f32.mxu0 0.0
      %885 = vmatmul.mubr.f32.gmra.mrb[0].mxu0 %v742
      %v886 = vpop.f32.mrb[0].mxu0
      %v887 = vadd.f32 %v773, %v886
      %v888 = vpop.f32.mrb[0].mxu0
      %889 = vmatprep.mubr.f32.mxu0 0.0
      %890 = vmatmul.mubr.f32.gmra.mrb[0].mxu0 %v743
      %v891 = vpop.f32.mrb[0].mxu0
      %v892 = vadd.f32 %v773, %v891
      %v893 = vpop.f32.mrb[0].mxu0
      %894 = vmatprep.mubr.f32.mxu0 0.0
      %895 = vmatmul.mubr.f32.gmra.mrb[0].mxu0 %v744
      %v896 = vpop.f32.mrb[0].mxu0
      %v897 = vadd.f32 %v773, %v896
      %v898 = vpop.f32.mrb[0].mxu0
      %899 = vmatprep.mubr.f32.mxu0 0.0
      %900 = vmatmul.mubr.f32.gmra.mrb[0].mxu0 %v745
      %v901 = vpop.f32.mrb[0].mxu0
      %v902 = vadd.f32 %v773, %v901
      %v903 = vpop.f32.mrb[0].mxu0
      %904 = vmatprep.mubr.f32.mxu0 0.0
      %905 = vmatmul.mubr.f32.gmra.mrb[0].mxu0 %v746
      %v906 = vpop.f32.mrb[0].mxu0
      %v907 = vadd.f32 %v773, %v906
      %v908 = vpop.f32.mrb[0].mxu0
      %909 = vmatprep.mubr.f32.mxu0 0.0
      %910 = vmatmul.mubr.f32.gmra.mrb[0].mxu0 %v747
      %v911 = vpop.f32.mrb[0].mxu0
      %v912 = vadd.f32 %v773, %v911
      %v913 = vpop.f32.mrb[0].mxu0
      %914 = vmatprep.mubr.f32.mxu0 0.0
      %915 = vmatmul.mubr.f32.gmra.mrb[0].mxu0 %v748
      %v916 = vpop.f32.mrb[0].mxu0
      %v917 = vadd.f32 %v773, %v916
      %v918 = vpop.f32.mrb[0].mxu0
      %919 = vmatprep.mubr.f32.mxu0 0.0
      %920 = vmatmul.mubr.f32.gmra.mrb[0].mxu0 %v749
      %v921 = vpop.f32.mrb[0].mxu0
      %v922 = vadd.f32 %v773, %v921
      %v923 = vpop.f32.mrb[0].mxu0
      %924 = vmatprep.mubr.f32.mxu0 0.0
      %925 = vmatmul.mubr.f32.gmra.mrb[0].mxu0 %v750
      %v926 = vpop.f32.mrb[0].mxu0
      %v927 = vadd.f32 %v773, %v926
      %v928 = vpop.f32.mrb[0].mxu0
      %929 = vmatprep.mubr.f32.mxu0 0.0
      %930 = vmatmul.mubr.f32.gmra.mrb[0].mxu0 %v751
      %v931 = vpop.f32.mrb[0].mxu0
      %v932 = vadd.f32 %v773, %v931
      %v933 = vpop.f32.mrb[0].mxu0
      %934 = vdwg.mxu0
      %vm935 = vcmask 23552
      %v936 = vsel %vm935, %v842, -inf
      %937 = vmax.xlane.f32.xlu0 %v936
      %v938 = vpop.xlane.xlu0 %937
      %v939 = vsel %vm935, %v847, -inf
      %940 = vmax.xlane.f32.xlu0 %v939
      %v941 = vpop.xlane.xlu0 %940
      %v942 = vsel %vm935, %v852, -inf
      %943 = vmax.xlane.f32.xlu0 %v942
      %v944 = vpop.xlane.xlu0 %943
      %v945 = vsel %vm935, %v857, -inf
      %946 = vmax.xlane.f32.xlu0 %v945
      %v947 = vpop.xlane.xlu0 %946
      %v948 = vsel %vm935, %v862, -inf
      %949 = vmax.xlane.f32.xlu0 %v948
      %v950 = vpop.xlane.xlu0 %949
      %v951 = vsel %vm935, %v867, -inf
      %952 = vmax.xlane.f32.xlu0 %v951
      %v953 = vpop.xlane.xlu0 %952
      %v954 = vsel %vm935, %v872, -inf
      %955 = vmax.xlane.f32.xlu0 %v954
      %v956 = vpop.xlane.xlu0 %955
      %v957 = vsel %vm935, %v877, -inf
      %958 = vmax.xlane.f32.xlu0 %v957
      %v959 = vpop.xlane.xlu0 %958
      %v960 = vsel %vm935, %v882, -inf
      %961 = vmax.xlane.f32.xlu0 %v960
      %v962 = vpop.xlane.xlu0 %961
      %v963 = vsel %vm935, %v887, -inf
      %964 = vmax.xlane.f32.xlu0 %v963
      %v965 = vpop.xlane.xlu0 %964
      %v966 = vsel %vm935, %v892, -inf
      %967 = vmax.xlane.f32.xlu0 %v966
      %v968 = vpop.xlane.xlu0 %967
      %v969 = vsel %vm935, %v897, -inf
      %970 = vmax.xlane.f32.xlu0 %v969
      %v971 = vpop.xlane.xlu0 %970
      %v972 = vsel %vm935, %v902, -inf
      %973 = vmax.xlane.f32.xlu0 %v972
      %v974 = vpop.xlane.xlu0 %973
      %v975 = vsel %vm935, %v907, -inf
      %976 = vmax.xlane.f32.xlu0 %v975
      %v977 = vpop.xlane.xlu0 %976
      %v978 = vsel %vm935, %v912, -inf
      %979 = vmax.xlane.f32.xlu0 %v978
      %v980 = vpop.xlane.xlu0 %979
      %v981 = vsel %vm935, %v917, -inf
      %982 = vmax.xlane.f32.xlu0 %v981
      %v983 = vpop.xlane.xlu0 %982
      %v984 = vsel %vm935, %v922, -inf
      %985 = vmax.xlane.f32.xlu0 %v984
      %v986 = vpop.xlane.xlu0 %985
      %v987 = vsel %vm935, %v927, -inf
      %988 = vmax.xlane.f32.xlu0 %v987
      %v989 = vpop.xlane.xlu0 %988
      %v990 = vsel %vm935, %v932, -inf
      %991 = vmax.xlane.f32.xlu0 %v990
      %v992 = vpop.xlane.xlu0 %991
      %v993 = vsub.f32 %v842, %v938
      %v994 = vsub.f32 %v847, %v941
      %v995 = vsub.f32 %v852, %v944
      %v996 = vsub.f32 %v857, %v947
      %v997 = vsub.f32 %v862, %v950
      %v998 = vsub.f32 %v867, %v953
      %v999 = vsub.f32 %v872, %v956
      %v1000 = vsub.f32 %v877, %v959
      %v1001 = vsub.f32 %v882, %v962
      %v1002 = vsub.f32 %v887, %v965
      %v1003 = vsub.f32 %v892, %v968
      %v1004 = vsub.f32 %v897, %v971
      %v1005 = vsub.f32 %v902, %v974
      %v1006 = vsub.f32 %v907, %v977
      %v1007 = vsub.f32 %v912, %v980
      %v1008 = vsub.f32 %v917, %v983
      %v1009 = vsub.f32 %v922, %v986
      %v1010 = vsub.f32 %v927, %v989
      %v1011 = vsub.f32 %v932, %v992
      %v1012 = vmul.f32 %v993, 1.442695
      %v1013 = vpow.pop %v1012
      %v1014 = vmul.f32 %v994, 1.442695
      %v1015 = vpow.pop %v1014
      %v1016 = vmul.f32 %v995, 1.442695
      %v1017 = vpow.pop %v1016
      %v1018 = vmul.f32 %v996, 1.442695
      %v1019 = vpow.pop %v1018
      %v1020 = vmul.f32 %v997, 1.442695
      %v1021 = vpow.pop %v1020
      %v1022 = vmul.f32 %v998, 1.442695
      %v1023 = vpow.pop %v1022
      %v1024 = vmul.f32 %v999, 1.442695
      %v1025 = vpow.pop %v1024
      %v1026 = vmul.f32 %v1000, 1.442695
      %v1027 = vpow.pop %v1026
      %v1028 = vmul.f32 %v1001, 1.442695
      %v1029 = vpow.pop %v1028
      %v1030 = vmul.f32 %v1002, 1.442695
      %v1031 = vpow.pop %v1030
      %v1032 = vmul.f32 %v1003, 1.442695
      %v1033 = vpow.pop %v1032
      %v1034 = vmul.f32 %v1004, 1.442695
      %v1035 = vpow.pop %v1034
      %v1036 = vmul.f32 %v1005, 1.442695
      %v1037 = vpow.pop %v1036
      %v1038 = vmul.f32 %v1006, 1.442695
      %v1039 = vpow.pop %v1038
      %v1040 = vmul.f32 %v1007, 1.442695
      %v1041 = vpow.pop %v1040
      %v1042 = vmul.f32 %v1008, 1.442695
      %v1043 = vpow.pop %v1042
      %v1044 = vmul.f32 %v1009, 1.442695
      %v1045 = vpow.pop %v1044
      %v1046 = vmul.f32 %v1010, 1.442695
      %v1047 = vpow.pop %v1046
      %v1048 = vmul.f32 %v1011, 1.442695
      %v1049 = vpow.pop %v1048
      %v1050 = vsel %vm935, %v1013, 0.0
      %1051 = vadd.xlane.f32.xlu0 %v1050
      %v1052 = vpop.xlane.xlu0 %1051
      %v1053 = vsel %vm935, %v1015, 0.0
      %1054 = vadd.xlane.f32.xlu0 %v1053
      %v1055 = vpop.xlane.xlu0 %1054
      %v1056 = vsel %vm935, %v1017, 0.0
      %1057 = vadd.xlane.f32.xlu0 %v1056
      %v1058 = vpop.xlane.xlu0 %1057
      %v1059 = vsel %vm935, %v1019, 0.0
      %1060 = vadd.xlane.f32.xlu0 %v1059
      %v1061 = vpop.xlane.xlu0 %1060
      %v1062 = vsel %vm935, %v1021, 0.0
      %1063 = vadd.xlane.f32.xlu0 %v1062
      %v1064 = vpop.xlane.xlu0 %1063
      %v1065 = vsel %vm935, %v1023, 0.0
      %1066 = vadd.xlane.f32.xlu0 %v1065
      %v1067 = vpop.xlane.xlu0 %1066
      %v1068 = vsel %vm935, %v1025, 0.0
      %1069 = vadd.xlane.f32.xlu0 %v1068
      %v1070 = vpop.xlane.xlu0 %1069
      %v1071 = vsel %vm935, %v1027, 0.0
      %1072 = vadd.xlane.f32.xlu0 %v1071
      %v1073 = vpop.xlane.xlu0 %1072
      %v1074 = vsel %vm935, %v1029, 0.0
      %1075 = vadd.xlane.f32.xlu0 %v1074
      %v1076 = vpop.xlane.xlu0 %1075
      %v1077 = vsel %vm935, %v1031, 0.0
      %1078 = vadd.xlane.f32.xlu0 %v1077
      %v1079 = vpop.xlane.xlu0 %1078
      %v1080 = vsel %vm935, %v1033, 0.0
      %1081 = vadd.xlane.f32.xlu0 %v1080
      %v1082 = vpop.xlane.xlu0 %1081
      %v1083 = vsel %vm935, %v1035, 0.0
      %1084 = vadd.xlane.f32.xlu0 %v1083
      %v1085 = vpop.xlane.xlu0 %1084
      %v1086 = vsel %vm935, %v1037, 0.0
      %1087 = vadd.xlane.f32.xlu0 %v1086
      %v1088 = vpop.xlane.xlu0 %1087
      %v1089 = vsel %vm935, %v1039, 0.0
      %1090 = vadd.xlane.f32.xlu0 %v1089
      %v1091 = vpop.xlane.xlu0 %1090
      %v1092 = vsel %vm935, %v1041, 0.0
      %1093 = vadd.xlane.f32.xlu0 %v1092
      %v1094 = vpop.xlane.xlu0 %1093
      %v1095 = vsel %vm935, %v1043, 0.0
      %1096 = vadd.xlane.f32.xlu0 %v1095
      %v1097 = vpop.xlane.xlu0 %1096
      %v1098 = vsel %vm935, %v1045, 0.0
      %1099 = vadd.xlane.f32.xlu0 %v1098
      %v1100 = vpop.xlane.xlu0 %1099
      %v1101 = vsel %vm935, %v1047, 0.0
      %1102 = vadd.xlane.f32.xlu0 %v1101
      %v1103 = vpop.xlane.xlu0 %1102
      %v1104 = vsel %vm935, %v1049, 0.0
      %1105 = vadd.xlane.f32.xlu0 %v1104
      %v1106 = vpop.xlane.xlu0 %1105
      %v1107 = vrcp.pop %v1052
      %v1108 = vmul.f32 %v1013, %v1107
      %v1109 = vrcp.pop %v1055
      %v1110 = vmul.f32 %v1015, %v1109
      %v1111 = vrcp.pop %v1058
      %v1112 = vmul.f32 %v1017, %v1111
      %v1113 = vrcp.pop %v1061
      %v1114 = vmul.f32 %v1019, %v1113
      %v1115 = vrcp.pop %v1064
      %v1116 = vmul.f32 %v1021, %v1115
      %v1117 = vrcp.pop %v1067
      %v1118 = vmul.f32 %v1023, %v1117
      %v1119 = vrcp.pop %v1070
      %v1120 = vmul.f32 %v1025, %v1119
      %v1121 = vrcp.pop %v1073
      %v1122 = vmul.f32 %v1027, %v1121
      %v1123 = vrcp.pop %v1076
      %v1124 = vmul.f32 %v1029, %v1123
      %v1125 = vrcp.pop %v1079
      %v1126 = vmul.f32 %v1031, %v1125
      %v1127 = vrcp.pop %v1082
      %v1128 = vmul.f32 %v1033, %v1127
      %v1129 = vrcp.pop %v1085
      %v1130 = vmul.f32 %v1035, %v1129
      %v1131 = vrcp.pop %v1088
      %v1132 = vmul.f32 %v1037, %v1131
      %v1133 = vrcp.pop %v1091
      %v1134 = vmul.f32 %v1039, %v1133
      %v1135 = vrcp.pop %v1094
      %v1136 = vmul.f32 %v1041, %v1135
      %v1137 = vrcp.pop %v1097
      %v1138 = vmul.f32 %v1043, %v1137
      %v1139 = vrcp.pop %v1100
      %v1140 = vmul.f32 %v1045, %v1139
      %v1141 = vrcp.pop %v1103
      %v1142 = vmul.f32 %v1047, %v1141
      %v1143 = vrcp.pop %v1106
      %v1144 = vmul.f32 %v1049, %v1143
      %1145 = vst.msk [vmem:[%s280] sm:$0xff] %vm935, %v1108
      %1146 = vst.msk [vmem:[%s280 + $0x8] sm:$0xff] %vm935, %v1110
      %1147 = vst.msk [vmem:[%s280 + $0x10] sm:$0xff] %vm935, %v1112
      %1148 = vst.msk [vmem:[%s280 + $0x18] sm:$0xff] %vm935, %v1114
      %1149 = vst.msk [vmem:[%s280 + $0x20] sm:$0xff] %vm935, %v1116
      %1150 = vst.msk [vmem:[%s280 + $0x28] sm:$0xff] %vm935, %v1118
      %1151 = vst.msk [vmem:[%s280 + $0x30] sm:$0xff] %vm935, %v1120
      %1152 = vst.msk [vmem:[%s280 + $0x38] sm:$0xff] %vm935, %v1122
      %1153 = vst.msk [vmem:[%s280 + $0x40] sm:$0xff] %vm935, %v1124
      %1154 = vst.msk [vmem:[%s280 + $0x48] sm:$0xff] %vm935, %v1126
      %1155 = vst.msk [vmem:[%s280 + $0x50] sm:$0xff] %vm935, %v1128
      %1156 = vst.msk [vmem:[%s280 + $0x58] sm:$0xff] %vm935, %v1130
      %1157 = vst.msk [vmem:[%s280 + $0x60] sm:$0xff] %vm935, %v1132
      %1158 = vst.msk [vmem:[%s280 + $0x68] sm:$0xff] %vm935, %v1134
      %1159 = vst.msk [vmem:[%s280 + $0x70] sm:$0xff] %vm935, %v1136
      %1160 = vst.msk [vmem:[%s280 + $0x78] sm:$0xff] %vm935, %v1138
      %1161 = vst.msk [vmem:[%s280 + $0x80] sm:$0xff] %vm935, %v1140
      %1162 = vst.msk [vmem:[%s280 + $0x88] sm:$0xff] %vm935, %v1142
      %1163 = vst.msk [vmem:[%s280 + $0x90] sm:$0xff] %vm935, %v1144
      %s1164 = smul.u32 19, %s18
      %p1165 = scmp.lt.s32.totalorder %s1164, 37
      %s1166 = scalar_select %p1165, %s1164, 37
      %s1167 = smul.addr %s1166, 8
      %s1168 = scalar_lea.vmem %s7, %s1167
      // Predicated region
      $region49: #{tpu_custom_call.1} parent=47 // pred_check
        %p1169 = pneg %p188
      $region50: #{tpu_custom_call.1} parent=47 // pred_check_branch
        %1171 = sbr.rel (%p1169) target = $region52
      $region51: #{tpu_custom_call.1} parent=47 // pred_region
        %s1172 = smul.u32 19, %s18
      $region52: #{tpu_custom_call.1} parent=47 // pred_fallthru
        _
    $region48: #{tpu_custom_call.1} parent=5 // pred_fallthru
      _
    %p1173 = scmp.le.s32.totalorder 2, %s13
    // Predicated region
    $region53: #{tpu_custom_call.1} parent=5 // pred_check
      %p1174 = pneg %p1173
    $region54: #{tpu_custom_call.1} parent=5 // pred_check_branch
      %1176 = sbr.rel (%p1174) target = $region56
    $region55: #{tpu_custom_call.1} parent=5 // pred_region
      %s1177 = ssub.s32 %s13, 2
      // Predicated region
      $region57: #{tpu_custom_call.1} parent=55 // pred_check
        %p1178 = pneg %p194
      $region58: #{tpu_custom_call.1} parent=55 // pred_check_branch
        %1180 = sbr.rel (%p1178) target = $region60
      $region59: #{tpu_custom_call.1} parent=55 // pred_region
        %s1181 = smul.u32 19, %s19
        %p1182 = scmp.lt.s32.totalorder %s1181, 37
        %s1183 = scalar_select %p1182, %s1181, 37
        %s1184 = smul.addr %s1183, 8
        %s1185 = scalar_lea.vmem %s7, %s1184
      $region60: #{tpu_custom_call.1} parent=55 // pred_fallthru
        _
    $region56: #{tpu_custom_call.1} parent=5 // pred_fallthru
      _
  $region6: #{tpu_custom_call.1} parent=0 // loop_footer
    %s17 = sadd.s32 1, %s13
  $region7: #{tpu_custom_call.1} parent=0 // loop_footer_branch
    %12 = sbr.rel target = $region3
  $region8: #{tpu_custom_call.1} parent=0 // loop_exit
    _

</llo_original>
